<compile_context>
chip_gen: v7x
topology: tpu7x:2x2x1
jax: 0.10.0
libtpu: 0.0.40
codegen_flags: <defaults>
</compile_context>

<pallas_src>
import math

import jax
import jax.numpy as jnp
from jax.experimental import pallas as pl
from jax.experimental.pallas import tpu as pltpu


def _round_up(x, m):
    return (x + m - 1) // m * m


def _heads_kernel(x_ref, w1_ref, b1_ref, w2_ref, b2_ref, out_ref):
    # Fused first layer: one (tm, d) @ (d, 2h) MXU pass covers both heads.
    h1 = jnp.dot(x_ref[...], w1_ref[...], preferred_element_type=jnp.float32)
    h1 = jnp.maximum(h1 + b1_ref[...], 0.0)                     # (tm, 2h) f32
    # Fused second layer: block-diagonal (2h, 1+nc) weight -> one matmul and
    # one merged (tm, 1+nc) output store (bin logit in col 0, classes after).
    y = jnp.dot(h1.astype(w2_ref.dtype), w2_ref[...],
                preferred_element_type=jnp.float32)
    out_ref[...] = (y + b2_ref[...]).astype(out_ref.dtype)      # (tm, 1+nc)


def multi_task_heads(x, params, *, tm=512, matmul_dtype=None):
    """x: (..., d). Returns (bin_logits with shape x.shape[:-1],
    mul_logits with shape x.shape[:-1] + (nc,)).

    matmul_dtype: optionally cast x and weights (not biases) to e.g.
    jnp.bfloat16 for the MXU inputs; accumulation stays f32.
    """
    w1b, b1b, w2b, b2b, w1m, b1m, w2m, b2m = params
    d = x.shape[-1]
    h = w1b.shape[1]
    nc = w2m.shape[1]
    two_h = 2 * h
    n_out = 1 + nc
    out_dtype = x.dtype

    batch_shape = x.shape[:-1]
    M = int(math.prod(batch_shape)) if batch_shape else 1
    x2 = x.reshape(M, d)

    # Row tile: large enough to amortize per-grid-step overhead and fill MXU
    # rows, but never bigger than the (8-aligned) problem itself.
    tm = max(8, min(int(tm), _round_up(M, 8)))
    Mp = _round_up(M, tm)
    if Mp != M:                       # ragged M: pad instead of asserting
        x2 = jnp.pad(x2, ((0, Mp - M), (0, 0)))

    # --- Fuse the two heads' parameters (done once per call, outside the grid)
    f32 = jnp.float32
    w1_cat = jnp.concatenate([w1b, w1m], axis=1)                 # (d, 2h)
    b1_cat = jnp.concatenate([b1b, b1m], axis=1).astype(f32)     # (1, 2h)
    w2_cat = jnp.zeros((two_h, n_out), w2b.dtype)
    w2_cat = w2_cat.at[:h, :1].set(w2b)                          # block-diag
    w2_cat = w2_cat.at[h:, 1:].set(w2m)                          # (2h, 1+nc)
    b2_cat = jnp.concatenate([b2b, b2m], axis=1).astype(f32)     # (1, 1+nc)

    if matmul_dtype is not None:      # e.g. jnp.bfloat16 on v5e/v6e
        x2 = x2.astype(matmul_dtype)
        w1_cat = w1_cat.astype(matmul_dtype)
        w2_cat = w2_cat.astype(matmul_dtype)

    grid = (Mp // tm,)
    itemsize = jnp.dtype(x2.dtype).itemsize

    # Whole-array (replicated, constant-index) blocks for the fused weights.
    # NOTE: they stay default double-buffered; after fusion they are small
    # (d*(d+1+nc) words).  pipeline_mode=pl.Buffered(1) is the next lever if
    # d grows large enough for weight VMEM to matter (esp. on v7x).
    def rep(shape):
        return pl.BlockSpec(shape, lambda i: (0, 0))

    # Cost hint for XLA scheduling around the custom call.
    flops = 2 * Mp * d * two_h + 2 * Mp * two_h * n_out
    bytes_accessed = (
        Mp * d * itemsize
        + (d * two_h + two_h * n_out) * itemsize
        + (two_h + n_out) * 4
        + Mp * n_out * jnp.dtype(out_dtype).itemsize
    )

    # VMEM budget: x tile (double-buffered) + weights (double-buffered) +
    # merged output tile (double-buffered), padded to lane/sublane layout,
    # with 2x slack.  Capped at 64 MiB (v7x physical VMEM).
    lane = 128
    est = (
        2 * tm * _round_up(d, lane)
        + 2 * _round_up(d, 8) * _round_up(two_h, lane)
        + 2 * _round_up(two_h, 8) * _round_up(n_out, lane)
        + 2 * tm * _round_up(n_out, lane)
        + 4 * 8 * lane
    ) * 4
    vmem_limit = int(min(max(2 * est, 16 * 1024 * 1024), 64 * 1024 * 1024))

    out = pl.pallas_call(
        _heads_kernel,
        out_shape=jax.ShapeDtypeStruct((Mp, n_out), out_dtype),
        grid_spec=pltpu.PrefetchScalarGridSpec(
            num_scalar_prefetch=0,
            grid=grid,
            in_specs=[
                pl.BlockSpec((tm, d), lambda i: (i, 0)),   # streamed x rows
                rep((d, two_h)), rep((1, two_h)),          # fused layer 1
                rep((two_h, n_out)), rep((1, n_out)),      # fused layer 2
            ],
            out_specs=pl.BlockSpec((tm, n_out), lambda i: (i, 0)),
        ),
        compiler_params=pltpu.CompilerParams(
            dimension_semantics=("parallel",),   # shard row tiles across TCs
            vmem_limit_bytes=vmem_limit,
        ),
        cost_estimate=pl.CostEstimate(
            flops=int(flops), transcendentals=0,
            bytes_accessed=int(bytes_accessed)),
    )(x2, w1_cat, b1_cat, w2_cat, b2_cat)

    out = out[:M]
    bin_out = out[:, 0].reshape(batch_shape)
    mul_out = out[:, 1:].reshape(batch_shape + (nc,))
    return bin_out, mul_out


def init_params(key, d, nc, dtype=jnp.float32):
    """Deterministic parameter init. Linear weights stored as (in, out)."""
    h = d // 2
    ks = jax.random.split(key, 8)

    def lin(kw, kb, fan_in, fan_out):
        bound = 1.0 / jnp.sqrt(fan_in)
        w = jax.random.uniform(kw, (fan_in, fan_out), dtype, -bound, bound)
        b = jax.random.uniform(kb, (1, fan_out), dtype, -bound, bound)
        return w, b

    w1b, b1b = lin(ks[0], ks[1], d, h)
    w2b, b2b = lin(ks[2], ks[3], h, 1)
    w1m, b1m = lin(ks[4], ks[5], d, h)
    w2m, b2m = lin(ks[6], ks[7], h, nc)
    return (w1b, b1b, w2b, b2b, w1m, b1m, w2m, b2m)


def reference(x, params):
    w1b, b1b, w2b, b2b, w1m, b1m, w2m, b2m = params
    hb = jnp.maximum(x @ w1b + b1b[0], 0.0)
    yb = (hb @ w2b + b2b[0]).squeeze(-1)
    hm = jnp.maximum(x @ w1m + b1m[0], 0.0)
    ym = hm @ w2m + b2m[0]
    return yb, ym


if __name__ == "__main__":
    key = jax.random.PRNGKey(0)
    kx, kp, kx2 = jax.random.split(key, 3)

    # Small shapes consistent with the module.
    B, T, d, nc = 2, 8, 32, 4
    x = jax.random.normal(kx, (B, T, d), dtype=jnp.float32)
    params = init_params(kp, d, nc)

    bin_out, mul_out = multi_task_heads(x, params)
    jax.block_until_ready((bin_out, mul_out))
    ref_bin, ref_mul = reference(x, params)
    assert bin_out.shape == (B, T)
    assert mul_out.shape == (B, T, nc)
    assert jnp.allclose(bin_out, ref_bin, atol=1e-4, rtol=1e-4)
    assert jnp.allclose(mul_out, ref_mul, atol=1e-4, rtol=1e-4)

    # Ragged-M / multi-step-grid path (exercises padding + 'parallel' axis).
    B2, T2 = 3, 100                       # M = 300, not a multiple of tm
    x_big = jax.random.normal(kx2, (B2, T2, d), dtype=jnp.float32)
    bin2, mul2 = multi_task_heads(x_big, params, tm=128)
    jax.block_until_ready((bin2, mul2))
    ref_bin2, ref_mul2 = reference(x_big, params)
    assert bin2.shape == (B2, T2)
    assert mul2.shape == (B2, T2, nc)
    assert jnp.allclose(bin2, ref_bin2, atol=1e-4, rtol=1e-4)
    assert jnp.allclose(mul2, ref_mul2, atol=1e-4, rtol=1e-4)

    print("KERNEL_OK")
</pallas_src>

<mosaic_0001>
module attributes {stable_mosaic.version = 11 : i64} {
  func.func @_heads_kernel(%arg0: i32, %arg1: memref<16x32xf32, #tpu.memory_space<vmem>>, %arg2: memref<32x32xf32, #tpu.memory_space<vmem>>, %arg3: memref<1x32xf32, #tpu.memory_space<vmem>>, %arg4: memref<32x5xf32, #tpu.memory_space<vmem>>, %arg5: memref<1x5xf32, #tpu.memory_space<vmem>>, %arg6: memref<16x5xf32, #tpu.memory_space<vmem>>) attributes {dimension_semantics = [#tpu.dimension_semantics<parallel>], iteration_bounds = array<i64: 1>, scalar_prefetch = 0 : i64, scratch_operands = 0 : i64, tpu.core_type = #tpu.core_type<tc>, window_params = [{transform_indices = @transform_0, window_bounds = array<i64: 16, 32>}, {pipeline_mode = #tpu.pipeline_mode<synchronous>, transform_indices = @transform_1, window_bounds = array<i64: 32, 32>}, {pipeline_mode = #tpu.pipeline_mode<synchronous>, transform_indices = @transform_2, window_bounds = array<i64: 1, 32>}, {pipeline_mode = #tpu.pipeline_mode<synchronous>, transform_indices = @transform_3, window_bounds = array<i64: 32, 5>}, {pipeline_mode = #tpu.pipeline_mode<synchronous>, transform_indices = @transform_4, window_bounds = array<i64: 1, 5>}, {transform_indices = @transform_5, window_bounds = array<i64: 16, 5>}]} {
    %c0 = arith.constant 0 : index
    %c0_0 = arith.constant 0 : index
    %0 = vector.load %arg1[%c0, %c0_0] : memref<16x32xf32, #tpu.memory_space<vmem>>, vector<16x32xf32>
    %c0_1 = arith.constant 0 : index
    %c0_2 = arith.constant 0 : index
    %1 = vector.load %arg2[%c0_1, %c0_2] : memref<32x32xf32, #tpu.memory_space<vmem>>, vector<32x32xf32>
    %cst = arith.constant dense<0.000000e+00> : vector<16x32xf32>
    %2 = tpu.matmul %0, %1, %cst {dimension_numbers = #tpu.dot_dimension_numbers<[1], [0], [0], [1], [0, 0, 1, 1], [], []>} : vector<16x32xf32>, vector<32x32xf32>, vector<16x32xf32> -> vector<16x32xf32>
    %c0_3 = arith.constant 0 : index
    %c0_4 = arith.constant 0 : index
    %3 = vector.load %arg3[%c0_3, %c0_4] : memref<1x32xf32, #tpu.memory_space<vmem>>, vector<1x32xf32>
    %4 = vector.broadcast %3 : vector<1x32xf32> to vector<16x32xf32>
    %5 = arith.addf %2, %4 : vector<16x32xf32>
    %cst_5 = arith.constant 0.000000e+00 : f32
    %6 = vector.broadcast %cst_5 : f32 to vector<16x32xf32>
    %7 = arith.maximumf %5, %6 : vector<16x32xf32>
    %c0_6 = arith.constant 0 : index
    %c0_7 = arith.constant 0 : index
    %8 = vector.load %arg4[%c0_6, %c0_7] : memref<32x5xf32, #tpu.memory_space<vmem>>, vector<32x5xf32>
    %cst_8 = arith.constant dense<0.000000e+00> : vector<16x5xf32>
    %9 = tpu.matmul %7, %8, %cst_8 {dimension_numbers = #tpu.dot_dimension_numbers<[1], [0], [0], [1], [0, 0, 1, 1], [], []>} : vector<16x32xf32>, vector<32x5xf32>, vector<16x5xf32> -> vector<16x5xf32>
    %c0_9 = arith.constant 0 : index
    %c0_10 = arith.constant 0 : index
    %10 = vector.load %arg5[%c0_9, %c0_10] : memref<1x5xf32, #tpu.memory_space<vmem>>, vector<1x5xf32>
    %11 = vector.broadcast %10 : vector<1x5xf32> to vector<16x5xf32>
    %12 = arith.addf %9, %11 : vector<16x5xf32>
    %c0_11 = arith.constant 0 : index
    %c0_12 = arith.constant 0 : index
    %13 = vector.load %arg6[%c0_11, %c0_12] : memref<16x5xf32, #tpu.memory_space<vmem>>, vector<16x5xf32>
    tpu.vector_store %arg6[%c0_11, %c0_12], %12 {strides = array<i32>} : memref<16x5xf32, #tpu.memory_space<vmem>>, vector<16x5xf32>,
    return
  }
  func.func @transform_0(%arg0: i32) -> (i32, i32) {
    %c0_i32 = arith.constant 0 : i32
    %c0_i32_0 = arith.constant 0 : i32
    return %arg0, %c0_i32 : i32, i32
  }
  func.func @transform_1(%arg0: i32) -> (i32, i32) {
    %c0_i32 = arith.constant 0 : i32
    %c0_i32_0 = arith.constant 0 : i32
    %c0_i32_1 = arith.constant 0 : i32
    return %c0_i32, %c0_i32_0 : i32, i32
  }
  func.func @transform_2(%arg0: i32) -> (i32, i32) {
    %c0_i32 = arith.constant 0 : i32
    %c0_i32_0 = arith.constant 0 : i32
    %c0_i32_1 = arith.constant 0 : i32
    return %c0_i32, %c0_i32_0 : i32, i32
  }
  func.func @transform_3(%arg0: i32) -> (i32, i32) {
    %c0_i32 = arith.constant 0 : i32
    %c0_i32_0 = arith.constant 0 : i32
    %c0_i32_1 = arith.constant 0 : i32
    return %c0_i32, %c0_i32_0 : i32, i32
  }
  func.func @transform_4(%arg0: i32) -> (i32, i32) {
    %c0_i32 = arith.constant 0 : i32
    %c0_i32_0 = arith.constant 0 : i32
    %c0_i32_1 = arith.constant 0 : i32
    return %c0_i32, %c0_i32_0 : i32, i32
  }
  func.func @transform_5(%arg0: i32) -> (i32, i32) {
    %c0_i32 = arith.constant 0 : i32
    %c0_i32_0 = arith.constant 0 : i32
    return %arg0, %c0_i32 : i32, i32
  }
}

</mosaic_0001>

<llo_original>
// kernel: tpu_custom_call.1
$region0: #{tpu_custom_call.1}
  #allocation0 [shape = 'u32[]', space=smem, size = 0x4, offset = 0x4, fixed_abs, tag = 'smem constant byte address 0x4 - core index']
  #allocation1 [shape = 'u32[144,128]{1,0:T(1,128)}', space=vmem, size = 0x12000, scoped, tag = 'internal scratch']
  %s0 = inlined_call_operand.hbm [shape: f32[16,32], index: 0, kind: input, shape index: {}]
  %s1 = inlined_call_operand.vmem [shape: f32[32,32], index: 1, kind: input, shape index: {}]
  %s2 = inlined_call_operand.vmem [shape: f32[1,32], index: 2, kind: input, shape index: {}]
  %s3 = inlined_call_operand.vmem [shape: f32[32,5], index: 3, kind: input, shape index: {}]
  %s4 = inlined_call_operand.vmem [shape: f32[1,5], index: 4, kind: input, shape index: {}]
  %s5 = inlined_call_operand.vmem [shape: f32[16,5], index: 5, kind: output, shape index: {}]
  %s6 = sld [smem:[#allocation0]]
  $region34: #{tpu_custom_call.1} parent=0
    _
  %s8 = ssub.s32 1, %s6
  %s9 = scalar_select 0, %s8, %s6
  $region1: #{tpu_custom_call.1} parent=0
    #allocation2 [shape = 'u8[8192]{0}', space=vmem, size = 0x2000, scoped, tag = 'input window, operand 0, single buffered']
    #allocation3 [shape = 's32[1]{0}', space=sflag, size = 0x4, scoped, tag = 'scoped memory for tpu_custom_call.1']
    %10 = vsyncpa [#allocation3], 0
    // Predicated region
    $region2: #{tpu_custom_call.1} parent=1 // pred_check
      _
    $region3: #{tpu_custom_call.1} parent=1 // pred_check_branch
      %12 = sbr.rel (0) target = $region5
    $region4: #{tpu_custom_call.1} parent=1 // pred_region
      %s14 = ssub.s32 256, 256
      %15 = vsyncadd [#allocation3], %s14
      %s16 = sshll.u32 [#allocation2], 4
      %s17 = int_to_ptr.vmem [resolvable:$true] %s16
      %22 = dma.hbm_to_vmem [thread:$0]  %s0, 256, %s17, [#allocation3], 128, 128, 8
    $region5: #{tpu_custom_call.1} parent=1 // pred_fallthru
      _
    // Predicated region
    $region6: #{tpu_custom_call.1} parent=1 // pred_check
      _
    $region7: #{tpu_custom_call.1} parent=1 // pred_check_branch
      %24 = sbr.rel (0) target = $region9
    $region8: #{tpu_custom_call.1} parent=1 // pred_region
      _
    $region9: #{tpu_custom_call.1} parent=1 // pred_fallthru
      _
    // Predicated region
    $region10: #{tpu_custom_call.1} parent=1 // pred_check
      _
    $region11: #{tpu_custom_call.1} parent=1 // pred_check_branch
      %26 = sbr.rel (0) target = $region13
    $region12: #{tpu_custom_call.1} parent=1 // pred_region
      _
    $region13: #{tpu_custom_call.1} parent=1 // pred_fallthru
      _
    // Predicated region
    $region14: #{tpu_custom_call.1} parent=1 // pred_check
      _
    $region15: #{tpu_custom_call.1} parent=1 // pred_check_branch
      %28 = sbr.rel (0) target = $region17
    $region16: #{tpu_custom_call.1} parent=1 // pred_region
      _
    $region17: #{tpu_custom_call.1} parent=1 // pred_fallthru
      _
    // Predicated region
    $region18: #{tpu_custom_call.1} parent=1 // pred_check
      _
    $region19: #{tpu_custom_call.1} parent=1 // pred_check_branch
      %30 = sbr.rel (0) target = $region21
    $region20: #{tpu_custom_call.1} parent=1 // pred_region
      _
    $region21: #{tpu_custom_call.1} parent=1 // pred_fallthru
      _
    // Predicated region
    $region22: #{tpu_custom_call.1} parent=1 // pred_check
      _
    $region23: #{tpu_custom_call.1} parent=1 // pred_check_branch
      %32 = sbr.rel (0) target = $region25
    $region24: #{tpu_custom_call.1} parent=1 // pred_region
      %33 = dma.done [#allocation3], 256
    $region25: #{tpu_custom_call.1} parent=1 // pred_fallthru
      _
    %v34 = vld [vmem:[#allocation2] sm:$0xff]
    %v35 = vld [vmem:[#allocation2 + $0x8] sm:$0xff]
    %v36 = vld [vmem:[%s1] sm:$0xff]
    %v37 = vld [vmem:[%s1 + $0x8] sm:$0xff]
    %v38 = vld [vmem:[%s1 + $0x10] sm:$0xff]
    %v39 = vld [vmem:[%s1 + $0x18] sm:$0xff]
    %v40 = vld [vmem:[%s2] sm:$0x1]
    %v42 = vlaneseq
    %v43 = vshrl.u32 %v42, 7
    %v44 = vsub.s32 0, %v43
    %v45 = vrot.slane %v40, %v44
    %vm47 = vcmask 261120
    %v49 = vsel %vm47, %v34, 0
    %v52 = vsel %vm47, %v35, 0
    %54 = vmatprep.subr.mxu0 0.0
    %55 = vmatpush1.msra.mxu0 %v36
    %56 = vmatprep.subr.mxu0 0.0
    %57 = vmatpush1.msra.mxu0 %v37
    %58 = vmatprep.subr.mxu0 0.0
    %59 = vmatpush1.msra.mxu0 %v38
    %60 = vmatprep.subr.mxu0 0.0
    %61 = vmatpush1.msra.mxu0 %v39
    %62 = vmatprep.subr.mxu0 0.0
    %63 = vmatpush1.msra.mxu0 0.0
    %64 = vmatprep.subr.mxu0 0.0
    %65 = vmatpush1.msra.mxu0 0.0
    %66 = vmatprep.subr.mxu0 0.0
    %67 = vmatpush1.msra.mxu0 0.0
    %68 = vmatprep.subr.mxu0 0.0
    %69 = vmatpush1.msra.mxu0 0.0
    %70 = vmatprep.subr.mxu0 0.0
    %71 = vmatpush1.msra.mxu0 0.0
    %72 = vmatprep.subr.mxu0 0.0
    %73 = vmatpush1.msra.mxu0 0.0
    %74 = vmatprep.subr.mxu0 0.0
    %75 = vmatpush1.msra.mxu0 0.0
    %76 = vmatprep.subr.mxu0 0.0
    %77 = vmatpush1.msra.mxu0 0.0
    %78 = vmatprep.subr.mxu0 0.0
    %79 = vmatpush1.msra.mxu0 0.0
    %80 = vmatprep.subr.mxu0 0.0
    %81 = vmatpush1.msra.mxu0 0.0
    %82 = vmatprep.subr.mxu0 0.0
    %83 = vmatpush1.msra.mxu0 0.0
    %84 = vmatprep.subr.mxu0 0.0
    %85 = vmatpush1.msra.mxu0 0.0
    %86 = vmatprep.subr.mxu0 0.0
    %87 = vmatpush1.msra.mxu0 0.0
    %88 = vmatprep.subr.mxu0 0.0
    %89 = vmatpush1.msra.mxu0 0.0
    %90 = vmatprep.subr.mxu0 0.0
    %91 = vmatpush1.msra.mxu0 0.0
    %92 = vmatprep.subr.mxu0 0.0
    %93 = vmatpush1.msra.mxu0 0.0
    %94 = vmatprep.subr.mxu0 0.0
    %95 = vmatpush1.msra.mxu0 0.0
    %96 = vmatprep.subr.mxu0 0.0
    %97 = vmatpush1.msra.mxu0 0.0
    %98 = vmatprep.subr.mxu0 0.0
    %99 = vmatpush1.msra.mxu0 0.0
    %100 = vmatprep.subr.mxu0 0.0
    %101 = vmatpush1.msra.mxu0 0.0
    %102 = vmatprep.subr.mxu0 0.0
    %103 = vmatpush1.msra.mxu0 0.0
    %104 = vmatprep.subr.mxu0 0.0
    %105 = vmatpush1.msra.mxu0 0.0
    %106 = vmatprep.subr.mxu0 0.0
    %107 = vmatpush1.msra.mxu0 0.0
    %108 = vmatprep.subr.mxu0 0.0
    %109 = vmatpush1.msra.mxu0 0.0
    %110 = vmatprep.subr.mxu0 0.0
    %111 = vmatpush1.msra.mxu0 0.0
    %112 = vmatprep.subr.mxu0 0.0
    %113 = vmatpush1.msra.mxu0 0.0
    %114 = vmatprep.subr.mxu0 0.0
    %115 = vmatpush1.msra.mxu0 0.0
    %116 = vmatprep.subr.mxu0 0.0
    %117 = vmatpush1.msra.mxu0 0.0
    %118 = vmatprep.mubr.f32.mxu0 0.0
    %119 = vmatmul.mubr.f32.gmra.mrb[0].mxu0 %v49
    %v120 = vpop.f32.mrb[0].mxu0
    %v121 = vadd.f32 %v45, %v120
    %v122 = vpop.f32.mrb[0].mxu0
    %123 = vmatprep.mubr.f32.mxu0 0.0
    %124 = vmatmul.mubr.f32.gmra.mrb[0].mxu0 %v52
    %v125 = vpop.f32.mrb[0].mxu0
    %v126 = vadd.f32 %v45, %v125
    %v127 = vpop.f32.mrb[0].mxu0
    %128 = vdwg.mxu0
    %v129 = vmax.f32 %v121, 0.0
    %v130 = vmax.f32 %v126, 0.0
    %v131 = vld [vmem:[%s3] sm:$0xff]
    %v132 = vld [vmem:[%s3 + $0x8] sm:$0xff]
    %v133 = vld [vmem:[%s3 + $0x10] sm:$0xff]
    %v134 = vld [vmem:[%s3 + $0x18] sm:$0xff]
    %v135 = vld [vmem:[%s4] sm:$0x1]
    %v137 = vlaneseq
    %v138 = vshrl.u32 %v137, 7
    %v139 = vsub.s32 0, %v138
    %v140 = vrot.slane %v135, %v139
    %v143 = vsel %vm47, %v129, 0
    %v146 = vsel %vm47, %v130, 0
    %148 = vmatprep.subr.mxu0 0.0
    %149 = vmatpush1.msra.mxu0 %v131
    %150 = vmatprep.subr.mxu0 0.0
    %151 = vmatpush1.msra.mxu0 %v132
    %152 = vmatprep.subr.mxu0 0.0
    %153 = vmatpush1.msra.mxu0 %v133
    %154 = vmatprep.subr.mxu0 0.0
    %155 = vmatpush1.msra.mxu0 %v134
    %156 = vmatprep.subr.mxu0 0.0
    %157 = vmatpush1.msra.mxu0 0.0
    %158 = vmatprep.subr.mxu0 0.0
    %159 = vmatpush1.msra.mxu0 0.0
    %160 = vmatprep.subr.mxu0 0.0
    %161 = vmatpush1.msra.mxu0 0.0
    %162 = vmatprep.subr.mxu0 0.0
    %163 = vmatpush1.msra.mxu0 0.0
    %164 = vmatprep.subr.mxu0 0.0
    %165 = vmatpush1.msra.mxu0 0.0
    %166 = vmatprep.subr.mxu0 0.0
    %167 = vmatpush1.msra.mxu0 0.0
    %168 = vmatprep.subr.mxu0 0.0
    %169 = vmatpush1.msra.mxu0 0.0
    %170 = vmatprep.subr.mxu0 0.0
    %171 = vmatpush1.msra.mxu0 0.0
    %172 = vmatprep.subr.mxu0 0.0
    %173 = vmatpush1.msra.mxu0 0.0
    %174 = vmatprep.subr.mxu0 0.0
    %175 = vmatpush1.msra.mxu0 0.0
    %176 = vmatprep.subr.mxu0 0.0
    %177 = vmatpush1.msra.mxu0 0.0
    %178 = vmatprep.subr.mxu0 0.0
    %179 = vmatpush1.msra.mxu0 0.0
    %180 = vmatprep.subr.mxu0 0.0
    %181 = vmatpush1.msra.mxu0 0.0
    %182 = vmatprep.subr.mxu0 0.0
    %183 = vmatpush1.msra.mxu0 0.0
    %184 = vmatprep.subr.mxu0 0.0
    %185 = vmatpush1.msra.mxu0 0.0
    %186 = vmatprep.subr.mxu0 0.0
    %187 = vmatpush1.msra.mxu0 0.0
    %188 = vmatprep.subr.mxu0 0.0
    %189 = vmatpush1.msra.mxu0 0.0
    %190 = vmatprep.subr.mxu0 0.0
    %191 = vmatpush1.msra.mxu0 0.0
    %192 = vmatprep.subr.mxu0 0.0
    %193 = vmatpush1.msra.mxu0 0.0
    %194 = vmatprep.subr.mxu0 0.0
    %195 = vmatpush1.msra.mxu0 0.0
    %196 = vmatprep.subr.mxu0 0.0
    %197 = vmatpush1.msra.mxu0 0.0
    %198 = vmatprep.subr.mxu0 0.0
    %199 = vmatpush1.msra.mxu0 0.0
    %200 = vmatprep.subr.mxu0 0.0
    %201 = vmatpush1.msra.mxu0 0.0
    %202 = vmatprep.subr.mxu0 0.0
    %203 = vmatpush1.msra.mxu0 0.0
    %204 = vmatprep.subr.mxu0 0.0
    %205 = vmatpush1.msra.mxu0 0.0
    %206 = vmatprep.subr.mxu0 0.0
    %207 = vmatpush1.msra.mxu0 0.0
    %208 = vmatprep.subr.mxu0 0.0
    %209 = vmatpush1.msra.mxu0 0.0
    %210 = vmatprep.subr.mxu0 0.0
    %211 = vmatpush1.msra.mxu0 0.0
    %212 = vmatprep.mubr.f32.mxu0 0.0
    %213 = vmatmul.mubr.f32.gmra.mrb[0].mxu0 %v143
    %v214 = vpop.f32.mrb[0].mxu0
    %v215 = vadd.f32 %v140, %v214
    %v216 = vpop.f32.mrb[0].mxu0
    %217 = vmatprep.mubr.f32.mxu0 0.0
    %218 = vmatmul.mubr.f32.gmra.mrb[0].mxu0 %v146
    %v219 = vpop.f32.mrb[0].mxu0
    %v220 = vadd.f32 %v140, %v219
    %v221 = vpop.f32.mrb[0].mxu0
    %222 = vdwg.mxu0
    %vm223 = vcmask 39936
    %224 = vst.msk [vmem:[%s5] sm:$0xff] %vm223, %v215
    %225 = vst.msk [vmem:[%s5 + $0x8] sm:$0xff] %vm223, %v220
    // Predicated region
    $region26: #{tpu_custom_call.1} parent=1 // pred_check
      _
    $region27: #{tpu_custom_call.1} parent=1 // pred_check_branch
      %227 = sbr.rel (0) target = $region29
    $region28: #{tpu_custom_call.1} parent=1 // pred_region
      _
    $region29: #{tpu_custom_call.1} parent=1 // pred_fallthru
      _
    // Predicated region
    $region30: #{tpu_custom_call.1} parent=1 // pred_check
      _
    $region31: #{tpu_custom_call.1} parent=1 // pred_check_branch
      %229 = sbr.rel (0) target = $region33
    $region32: #{tpu_custom_call.1} parent=1 // pred_region
      _
    $region33: #{tpu_custom_call.1} parent=1 // pred_fallthru
      _
    %230 = vsyncpa [#allocation3], 1

</llo_original>
